<compile_context>
chip_gen: v6e
topology: v6e:2x2x1
jax: 0.10.0
libtpu: 0.0.40
codegen_flags: <defaults>
</compile_context>

<pallas_src>
import functools

import jax
import jax.numpy as jnp
from jax.experimental import pallas as pl
from jax.experimental.pallas import tpu as pltpu


def _round_up(x, m):
    return ((x + m - 1) // m) * m


def _cdiv(a, b):
    return (a + b - 1) // b


def _num_tensorcores():
    """v7x has 2 TensorCores per chip; v5e/v6e have 1.  Best-effort detection."""
    try:
        kind = jax.devices()[0].device_kind.lower()
        return 2 if "v7" in kind else 1
    except Exception:
        return 1


def _linear_kernel(x_ref, w_ref, b_ref, o_ref):
    # x tile is f32 in VMEM; cast to bf16 on the VPU (no extra HBM traffic) so
    # the MXU gets native bf16 inputs.  Weight arrives bf16 from HBM (the
    # dominant traffic, halved vs f32).  Accumulate + bias add in f32.
    x_bf = x_ref[...].astype(jnp.bfloat16)
    acc = jnp.dot(x_bf, w_ref[...], preferred_element_type=jnp.float32)
    o_ref[...] = (acc + b_ref[...]).astype(o_ref.dtype)


def prepare_params(weight, bias, *, lane_pad=128):
    """One-time parameter prep (call at init / checkpoint load, NOT per step).

    weight: [output_dim, hidden_dim]   (PyTorch nn.Linear layout)
    bias:   [output_dim]
    Returns (w_t, b2, output_dim) where
      w_t: [hidden_dim, O_pad]  bf16, pre-transposed, zero-padded to x128 lanes
      b2:  [1, O_pad]           f32 (added on the f32 accumulator)
    """
    O, H = weight.shape
    O_pad = _round_up(O, lane_pad)
    w_t = (jnp.zeros((H, O_pad), jnp.bfloat16)
           .at[:, :O].set(weight.T.astype(jnp.bfloat16)))
    b2 = jnp.zeros((1, O_pad), jnp.float32).at[:, :O].set(
        bias.astype(jnp.float32))
    return w_t, b2, O


def _choose_tile_m(batch, cap, num_tc):
    """Batch-tile rows.

    x / output are f32 in HBM, so the sublane granule is 8 rows.  No forced
    multi-step floor: grid steps are sequential on single-TC v5e/v6e.  On v7x
    (2 TCs) we only split when the per-TC work amortizes the duplicated
    grid-invariant weight DMA and per-step overhead (>= 512 rows).
    """
    rows = _round_up(batch, 8)
    n_steps = _cdiv(rows, cap)
    if num_tc >= 2 and rows >= 512:
        n_steps = max(n_steps, 2)
    if n_steps == 1:
        return batch  # full-extent batch block: always legal, no edge masking
    return _round_up(_cdiv(rows, n_steps), 8)


@functools.partial(
    jax.jit,
    static_argnames=("output_dim", "tile_m_cap", "min_pallas_batch",
                     "return_padded"))
def prediction_forward(x, w_t, b2, *, output_dim, tile_m_cap=512,
                       min_pallas_batch=65, return_padded=False):
    """Equivalent of Prediction.forward: x @ W.T + b.

    x:   [B, hidden_dim] float32
    w_t: [hidden_dim, O_pad] bfloat16   (from prepare_params)
    b2:  [1, O_pad] float32             (from prepare_params)
    Returns [B, output_dim] float32 (or the lane-dense [B, O_pad] slab when
    return_padded=True).
    """
    B, H = x.shape
    Hw, O_pad = w_t.shape
    assert Hw == H, "weight / activation hidden_dim mismatch"

    if B < min_pallas_batch:
        # Tiny batch: total HBM traffic is ~100 KB, so a standalone
        # pallas_call is dominated by launch / wrapper overhead.  Use a plain
        # XLA linear (same bf16-input / f32-accumulate math) so it can fuse
        # with the producer.
        out = jnp.dot(x.astype(jnp.bfloat16), w_t,
                      preferred_element_type=jnp.float32) + b2
    else:
        tm = _choose_tile_m(B, tile_m_cap, _num_tensorcores())
        grid = (_cdiv(B, tm),)

        # Advisory scheduling hint (bf16 weight = 2 bytes/elem).
        flops = 2 * B * H * O_pad
        bytes_accessed = 4 * B * H + 2 * H * O_pad + 4 * O_pad + 4 * B * O_pad

        out = pl.pallas_call(
            _linear_kernel,
            out_shape=jax.ShapeDtypeStruct((B, O_pad), jnp.float32),
            grid_spec=pltpu.PrefetchScalarGridSpec(
                num_scalar_prefetch=0,
                grid=grid,
                in_specs=[
                    # Batch-tiled activations (double-buffered by default).
                    # Non-divisible B is handled by Pallas edge masking:
                    # garbage rows in a partial block are masked on store.
                    pl.BlockSpec((tm, H), lambda i: (i, 0)),
                    # Grid-invariant weight / bias: one buffer is enough.
                    pl.BlockSpec((H, O_pad), lambda i: (0, 0),
                                 pipeline_mode=pl.Buffered(1)),
                    pl.BlockSpec((1, O_pad), lambda i: (0, 0),
                                 pipeline_mode=pl.Buffered(1)),
                ],
                out_specs=pl.BlockSpec((tm, O_pad), lambda i: (i, 0)),
            ),
            compiler_params=pltpu.CompilerParams(
                dimension_semantics=("parallel",)),
            cost_estimate=pl.CostEstimate(
                flops=flops, transcendentals=0,
                bytes_accessed=bytes_accessed),
        )(x, w_t, b2)

    if return_padded:
        return out  # lane-dense [B, O_pad]; padded columns are exactly 0
    return out[:, :output_dim]


if __name__ == "__main__":
    hidden_dim = 32
    output_dim = 618

    key = jax.random.PRNGKey(0)
    kx, kw, kb, kx2 = jax.random.split(key, 4)

    # nn.Linear parameter shapes: weight [output_dim, hidden_dim], bias [output_dim]
    bound = 1.0 / (hidden_dim ** 0.5)
    weight = jax.random.uniform(
        kw, (output_dim, hidden_dim), minval=-bound, maxval=bound,
        dtype=jnp.float32)
    bias = jax.random.uniform(
        kb, (output_dim,), minval=-bound, maxval=bound, dtype=jnp.float32)

    # One-time parameter prep (transpose + lane-pad + bf16 cast).
    w_t, b2, out_dim = prepare_params(weight, bias)

    # --- Pallas path (forced), exact-tile small batch -----------------------
    batch = 8
    x = jax.random.normal(kx, (batch, hidden_dim), dtype=jnp.float32)
    out = jax.block_until_ready(
        prediction_forward(x, w_t, b2, output_dim=out_dim, min_pallas_batch=1))
    ref = x @ weight.T + bias
    assert out.shape == (batch, output_dim)
    # bf16 weight/activation inputs with f32 accumulate -> ~1e-2-level error.
    assert jnp.allclose(out, ref, atol=3e-2, rtol=3e-2), "pallas path mismatch"

    # --- Pallas path, non-divisible batch / multi-step (edge masking) ------
    batch2 = 37
    x2 = jax.random.normal(kx2, (batch2, hidden_dim), dtype=jnp.float32)
    out2 = jax.block_until_ready(
        prediction_forward(x2, w_t, b2, output_dim=out_dim,
                           tile_m_cap=16, min_pallas_batch=1))
    ref2 = x2 @ weight.T + bias
    assert out2.shape == (batch2, output_dim)
    assert jnp.allclose(out2, ref2, atol=3e-2, rtol=3e-2), "edge-tile mismatch"

    # --- Small-batch XLA-fused fallback (default dispatch at B=8) ----------
    out3 = jax.block_until_ready(
        prediction_forward(x, w_t, b2, output_dim=out_dim))
    assert out3.shape == (batch, output_dim)
    assert jnp.allclose(out3, ref, atol=3e-2, rtol=3e-2), "fallback mismatch"

    print("KERNEL_OK")
</pallas_src>

<mosaic_0001>
module attributes {stable_mosaic.version = 11 : i64} {
  func.func @_linear_kernel(%arg0: i32, %arg1: memref<8x32xf32, #tpu.memory_space<vmem>>, %arg2: memref<32x640xbf16, #tpu.memory_space<vmem>>, %arg3: memref<1x640xf32, #tpu.memory_space<vmem>>, %arg4: memref<8x640xf32, #tpu.memory_space<vmem>>) attributes {dimension_semantics = [#tpu.dimension_semantics<parallel>], iteration_bounds = array<i64: 1>, scalar_prefetch = 0 : i64, scratch_operands = 0 : i64, tpu.core_type = #tpu.core_type<tc>, window_params = [{transform_indices = @transform_0, window_bounds = array<i64: 8, 32>}, {pipeline_mode = #tpu.pipeline_mode<synchronous>, transform_indices = @transform_1, window_bounds = array<i64: 32, 640>}, {pipeline_mode = #tpu.pipeline_mode<synchronous>, transform_indices = @transform_2, window_bounds = array<i64: 1, 640>}, {transform_indices = @transform_3, window_bounds = array<i64: 8, 640>}]} {
    %c0 = arith.constant 0 : index
    %c0_0 = arith.constant 0 : index
    %0 = vector.load %arg1[%c0, %c0_0] : memref<8x32xf32, #tpu.memory_space<vmem>>, vector<8x32xf32>
    %1 = arith.truncf %0 : vector<8x32xf32> to vector<8x32xbf16>
    %c0_1 = arith.constant 0 : index
    %c0_2 = arith.constant 0 : index
    %2 = vector.load %arg2[%c0_1, %c0_2] : memref<32x640xbf16, #tpu.memory_space<vmem>>, vector<32x640xbf16>
    %cst = arith.constant dense<0.000000e+00> : vector<8x640xf32>
    %3 = tpu.matmul %1, %2, %cst {dimension_numbers = #tpu.dot_dimension_numbers<[1], [0], [0], [1], [0, 0, 1, 1], [], []>} : vector<8x32xbf16>, vector<32x640xbf16>, vector<8x640xf32> -> vector<8x640xf32>
    %c0_3 = arith.constant 0 : index
    %c0_4 = arith.constant 0 : index
    %4 = vector.load %arg3[%c0_3, %c0_4] : memref<1x640xf32, #tpu.memory_space<vmem>>, vector<1x640xf32>
    %5 = vector.broadcast %4 : vector<1x640xf32> to vector<8x640xf32>
    %6 = arith.addf %3, %5 : vector<8x640xf32>
    %c0_5 = arith.constant 0 : index
    %c0_6 = arith.constant 0 : index
    %7 = vector.load %arg4[%c0_5, %c0_6] : memref<8x640xf32, #tpu.memory_space<vmem>>, vector<8x640xf32>
    tpu.vector_store %arg4[%c0_5, %c0_6], %6 {strides = array<i32>} : memref<8x640xf32, #tpu.memory_space<vmem>>, vector<8x640xf32>,
    return
  }
  func.func @transform_0(%arg0: i32) -> (i32, i32) {
    %c0_i32 = arith.constant 0 : i32
    %c0_i32_0 = arith.constant 0 : i32
    return %arg0, %c0_i32 : i32, i32
  }
  func.func @transform_1(%arg0: i32) -> (i32, i32) {
    %c0_i32 = arith.constant 0 : i32
    %c0_i32_0 = arith.constant 0 : i32
    %c0_i32_1 = arith.constant 0 : i32
    return %c0_i32, %c0_i32_0 : i32, i32
  }
  func.func @transform_2(%arg0: i32) -> (i32, i32) {
    %c0_i32 = arith.constant 0 : i32
    %c0_i32_0 = arith.constant 0 : i32
    %c0_i32_1 = arith.constant 0 : i32
    return %c0_i32, %c0_i32_0 : i32, i32
  }
  func.func @transform_3(%arg0: i32) -> (i32, i32) {
    %c0_i32 = arith.constant 0 : i32
    %c0_i32_0 = arith.constant 0 : i32
    return %arg0, %c0_i32 : i32, i32
  }
}

</mosaic_0001>

<llo_original>
// kernel: prediction_forward.1
$region0: #{prediction_forward.1}
  #allocation0 [shape = 'u32[]', space=smem, size = 0x4, offset = 0x4, fixed_abs, tag = 'smem constant byte address 0x4 - core index']
  #allocation1 [shape = 'u32[144,128]{1,0:T(1,128)}', space=vmem, size = 0x12000, scoped, tag = 'internal scratch']
  %s0 = inlined_call_operand.hbm [shape: f32[8,32], index: 0, kind: input, shape index: {}]
  %s1 = inlined_call_operand.hbm [shape: bf16[32,640], index: 1, kind: input, shape index: {}]
  %s2 = inlined_call_operand.hbm [shape: f32[1,640], index: 2, kind: input, shape index: {}]
  %s3 = inlined_call_operand.hbm [shape: f32[8,640], index: 3, kind: output, shape index: {}]
  %s4 = sld [smem:[#allocation0]]
  $region34: #{prediction_forward.1} parent=0
    _
  %s6 = ssub.s32 1, %s4
  %s7 = scalar_select 0, %s6, %s4
  $region1: #{prediction_forward.1} parent=0
    #allocation2 [shape = 'u8[4096]{0}', space=vmem, size = 0x1000, scoped, tag = 'input window, operand 0, single buffered']
    #allocation3 [shape = 's32[1]{0}', space=sflag, size = 0x4, scoped, tag = 'scoped memory for prediction_forward.1']
    #allocation4 [shape = 's32[1]{0}', space=sflag, size = 0x4, scoped, tag = 'scoped memory for prediction_forward.1']
    #allocation5 [shape = 'u8[40960]{0}', space=vmem, size = 0xa000, scoped, tag = 'input window, operand 1, single buffered']
    #allocation6 [shape = 's32[1]{0}', space=sflag, size = 0x4, scoped, tag = 'scoped memory for prediction_forward.1']
    #allocation7 [shape = 'u8[2560]{0}', space=vmem, size = 0xc00, scoped, tag = 'input window, operand 2, single buffered']
    #allocation8 [shape = 'u8[20480]{0}', space=vmem, size = 0x5000, scoped, tag = 'output window, operand 0, single buffered']
    %8 = vsyncpa [#allocation3], 0
    %9 = vsyncpa [#allocation6], 0
    %10 = vsyncpa [#allocation4], 0
    // Predicated region
    $region2: #{prediction_forward.1} parent=1 // pred_check
      _
    $region3: #{prediction_forward.1} parent=1 // pred_check_branch
      %12 = sbr.rel (0) target = $region5
    $region4: #{prediction_forward.1} parent=1 // pred_region
      %s14 = ssub.s32 128, 128
      %15 = vsyncadd [#allocation3], %s14
      %s17 = sshll.u32 [#allocation2], 4
      %s18 = int_to_ptr.vmem [resolvable:$true] %s17
      %20 = dma.hbm_to_vmem [thread:$0]  %s0, 128, %s18, [#allocation3]
    $region5: #{prediction_forward.1} parent=1 // pred_fallthru
      _
    // Predicated region
    $region6: #{prediction_forward.1} parent=1 // pred_check
      _
    $region7: #{prediction_forward.1} parent=1 // pred_check_branch
      %22 = sbr.rel (0) target = $region9
    $region8: #{prediction_forward.1} parent=1 // pred_region
      %s24 = ssub.s32 1280, 1280
      %25 = vsyncadd [#allocation6], %s24
      %s26 = sshll.u32 [#allocation5], 4
      %s27 = int_to_ptr.vmem [resolvable:$true] %s26
      %32 = dma.hbm_to_vmem [thread:$0]  %s1, 1280, %s27, [#allocation6], 320, 320, 20
    $region9: #{prediction_forward.1} parent=1 // pred_fallthru
      _
    // Predicated region
    $region10: #{prediction_forward.1} parent=1 // pred_check
      _
    $region11: #{prediction_forward.1} parent=1 // pred_check_branch
      %34 = sbr.rel (0) target = $region13
    $region12: #{prediction_forward.1} parent=1 // pred_region
      %s36 = ssub.s32 80, 80
      %37 = vsyncadd [#allocation6], %s36
      %s39 = sshll.u32 [#allocation7], 4
      %s40 = int_to_ptr.vmem [resolvable:$true] %s39
      %42 = dma.hbm_to_vmem [thread:$0]  %s2, 80, %s40, [#allocation6]
    $region13: #{prediction_forward.1} parent=1 // pred_fallthru
      _
    // Predicated region
    $region14: #{prediction_forward.1} parent=1 // pred_check
      _
    $region15: #{prediction_forward.1} parent=1 // pred_check_branch
      %44 = sbr.rel (0) target = $region17
    $region16: #{prediction_forward.1} parent=1 // pred_region
      %45 = dma.done [#allocation3], 128
    $region17: #{prediction_forward.1} parent=1 // pred_fallthru
      _
    // Predicated region
    $region18: #{prediction_forward.1} parent=1 // pred_check
      _
    $region19: #{prediction_forward.1} parent=1 // pred_check_branch
      %47 = sbr.rel (0) target = $region21
    $region20: #{prediction_forward.1} parent=1 // pred_region
      %48 = dma.done [#allocation6], 1280
    $region21: #{prediction_forward.1} parent=1 // pred_fallthru
      _
    // Predicated region
    $region22: #{prediction_forward.1} parent=1 // pred_check
      _
    $region23: #{prediction_forward.1} parent=1 // pred_check_branch
      %50 = sbr.rel (0) target = $region25
    $region24: #{prediction_forward.1} parent=1 // pred_region
      %51 = dma.done [#allocation6], 80
    $region25: #{prediction_forward.1} parent=1 // pred_fallthru
      _
    %v53 = vld [vmem:[#allocation2] sm:$0xff]
    %v54 = vpack.c.bf16 %v53, %v53
    %v55 = vld [vmem:[#allocation5] sm:$0xff]
    %v56 = vld [vmem:[#allocation5 + $0x8] sm:$0xff]
    %v57 = vld [vmem:[#allocation5 + $0x10] sm:$0xf]
    %v58 = vld [vmem:[#allocation5 + $0x14] sm:$0xff]
    %v59 = vld [vmem:[#allocation5 + $0x1c] sm:$0xff]
    %v60 = vld [vmem:[#allocation5 + $0x24] sm:$0xf]
    %v61 = vld [vmem:[#allocation5 + $0x28] sm:$0xff]
    %v62 = vld [vmem:[#allocation5 + $0x30] sm:$0xff]
    %v63 = vld [vmem:[#allocation5 + $0x38] sm:$0xf]
    %v64 = vld [vmem:[#allocation5 + $0x3c] sm:$0xff]
    %v65 = vld [vmem:[#allocation5 + $0x44] sm:$0xff]
    %v66 = vld [vmem:[#allocation5 + $0x4c] sm:$0xf]
    %v67 = vld [vmem:[#allocation7] sm:$0x1f]
    %v69 = vlaneseq
    %v70 = vshrl.u32 %v69, 7
    %v71 = vsub.s32 0, %v70
    %v72 = vrot.slane %v67, %v71
    %v73 = vlaneseq
    %v74 = vshrl.u32 %v73, 7
    %v75 = vsub.s32 1, %v74
    %v76 = vrot.slane %v67, %v75
    %v77 = vlaneseq
    %v78 = vshrl.u32 %v77, 7
    %v79 = vsub.s32 2, %v78
    %v80 = vrot.slane %v67, %v79
    %v81 = vlaneseq
    %v82 = vshrl.u32 %v81, 7
    %v83 = vsub.s32 3, %v82
    %v84 = vrot.slane %v67, %v83
    %v85 = vlaneseq
    %v86 = vshrl.u32 %v85, 7
    %v87 = vsub.s32 4, %v86
    %v88 = vrot.slane %v67, %v87
    %v106 = vunpack.c.l.b16 %v55
    %v107 = vunpack.c.h.b16 %v55
    %v108 = vunpack.c.l.b16 %v56
    %v109 = vunpack.c.h.b16 %v56
    %v110 = vunpack.c.l.b16 %v57
    %v111 = vunpack.c.l.b16 %v58
    %v112 = vunpack.c.h.b16 %v58
    %v113 = vunpack.c.l.b16 %v59
    %v114 = vunpack.c.h.b16 %v59
    %v115 = vunpack.c.l.b16 %v60
    %v116 = vunpack.c.l.b16 %v61
    %v117 = vunpack.c.h.b16 %v61
    %v118 = vunpack.c.l.b16 %v62
    %v119 = vunpack.c.h.b16 %v62
    %v120 = vunpack.c.l.b16 %v63
    %v121 = vunpack.c.l.b16 %v64
    %v122 = vunpack.c.h.b16 %v64
    %v123 = vunpack.c.l.b16 %v65
    %v124 = vunpack.c.h.b16 %v65
    %v125 = vunpack.c.l.b16 %v66
    %v126 = vpack.c.b16 %v111, %v106
    %v127 = vpack.c.b16 %v112, %v107
    %v128 = vpack.c.b16 %v113, %v108
    %v129 = vpack.c.b16 %v114, %v109
    %v130 = vpack.c.b16 %v115, %v110
    %v131 = vpack.c.b16 %v121, %v116
    %v132 = vpack.c.b16 %v122, %v117
    %v133 = vpack.c.b16 %v123, %v118
    %v134 = vpack.c.b16 %v124, %v119
    %v135 = vpack.c.b16 %v125, %v120
    %vm146 = vcmask 261120
    %v148 = vsel %vm146, %v54, 0
    %150 = vmatprep.subr.bf16.mxu0 0
    %151 = vmatpush1.bf16.msra.mxu0 0
    %152 = vmatprep.subr.bf16.mxu0 0
    %153 = vmatpush1.bf16.msra.mxu0 0
    %154 = vmatprep.subr.bf16.mxu0 0
    %155 = vmatpush1.bf16.msra.mxu0 0
    %156 = vmatprep.subr.bf16.mxu0 0
    %157 = vmatpush1.bf16.msra.mxu0 0
    %158 = vmatprep.subr.bf16.mxu0 0
    %159 = vmatpush1.bf16.msra.mxu0 0
    %160 = vmatprep.subr.bf16.mxu0 0
    %161 = vmatpush1.bf16.msra.mxu0 0
    %162 = vmatprep.subr.bf16.mxu0 %v132
    %163 = vmatpush1.bf16.msra.mxu0 %v131
    %164 = vmatprep.subr.bf16.mxu0 %v127
    %165 = vmatpush1.bf16.msra.mxu0 %v126
    %166 = vmatprep.subr.bf16.mxu0 0
    %167 = vmatpush2.bf16.msra.mxu0 0
    %168 = vmatprep.subr.bf16.mxu0 0
    %169 = vmatpush2.bf16.msra.mxu0 0
    %170 = vmatprep.subr.bf16.mxu0 0
    %171 = vmatpush2.bf16.msra.mxu0 0
    %172 = vmatprep.subr.bf16.mxu0 0
    %173 = vmatpush2.bf16.msra.mxu0 0
    %174 = vmatprep.subr.bf16.mxu0 0
    %175 = vmatpush2.bf16.msra.mxu0 0
    %176 = vmatprep.subr.bf16.mxu0 0
    %177 = vmatpush2.bf16.msra.mxu0 0
    %178 = vmatprep.subr.bf16.mxu0 0
    %179 = vmatpush2.bf16.msra.mxu0 0
    %180 = vmatprep.subr.bf16.mxu0 0
    %181 = vmatpush2.bf16.msra.mxu0 0
    %182 = vmatprep.mubr.bf16.mxu0 0
    %183 = vmatmul.mubr.bf16.gmra.mxu0 %v148
    %v184 = vpop.f32.mrf.mxu0
    %v185 = vadd.f32 %v72, %v184
    %v186 = vpop.f32.mrf.mxu0
    %v187 = vadd.f32 %v76, %v186
    %v188 = vpop.f32.mrf.mxu0
    %v189 = vpop.f32.mrf.mxu0
    %190 = vdwg.mxu0
    %191 = vmatprep.subr.bf16.mxu0 0
    %192 = vmatpush1.bf16.msra.mxu0 0
    %193 = vmatprep.subr.bf16.mxu0 0
    %194 = vmatpush1.bf16.msra.mxu0 0
    %195 = vmatprep.subr.bf16.mxu0 0
    %196 = vmatpush1.bf16.msra.mxu0 0
    %197 = vmatprep.subr.bf16.mxu0 0
    %198 = vmatpush1.bf16.msra.mxu0 0
    %199 = vmatprep.subr.bf16.mxu0 0
    %200 = vmatpush1.bf16.msra.mxu0 0
    %201 = vmatprep.subr.bf16.mxu0 0
    %202 = vmatpush1.bf16.msra.mxu0 0
    %203 = vmatprep.subr.bf16.mxu0 %v134
    %204 = vmatpush1.bf16.msra.mxu0 %v133
    %205 = vmatprep.subr.bf16.mxu0 %v129
    %206 = vmatpush1.bf16.msra.mxu0 %v128
    %207 = vmatprep.subr.bf16.mxu0 0
    %208 = vmatpush2.bf16.msra.mxu0 0
    %209 = vmatprep.subr.bf16.mxu0 0
    %210 = vmatpush2.bf16.msra.mxu0 0
    %211 = vmatprep.subr.bf16.mxu0 0
    %212 = vmatpush2.bf16.msra.mxu0 0
    %213 = vmatprep.subr.bf16.mxu0 0
    %214 = vmatpush2.bf16.msra.mxu0 0
    %215 = vmatprep.subr.bf16.mxu0 0
    %216 = vmatpush2.bf16.msra.mxu0 0
    %217 = vmatprep.subr.bf16.mxu0 0
    %218 = vmatpush2.bf16.msra.mxu0 0
    %219 = vmatprep.subr.bf16.mxu0 0
    %220 = vmatpush2.bf16.msra.mxu0 0
    %221 = vmatprep.subr.bf16.mxu0 0
    %222 = vmatpush2.bf16.msra.mxu0 0
    %223 = vmatprep.mubr.bf16.mxu0 0
    %224 = vmatmul.mubr.bf16.gmra.mxu0 %v148
    %v225 = vpop.f32.mrf.mxu0
    %v226 = vadd.f32 %v80, %v225
    %v227 = vpop.f32.mrf.mxu0
    %v228 = vadd.f32 %v84, %v227
    %v229 = vpop.f32.mrf.mxu0
    %v230 = vpop.f32.mrf.mxu0
    %231 = vdwg.mxu0
    %232 = vmatprep.subr.bf16.mxu0 0
    %233 = vmatpush1.bf16.msra.mxu0 0
    %234 = vmatprep.subr.bf16.mxu0 0
    %235 = vmatpush1.bf16.msra.mxu0 0
    %236 = vmatprep.subr.bf16.mxu0 0
    %237 = vmatpush1.bf16.msra.mxu0 0
    %238 = vmatprep.subr.bf16.mxu0 0
    %239 = vmatpush1.bf16.msra.mxu0 0
    %240 = vmatprep.subr.bf16.mxu0 0
    %241 = vmatpush1.bf16.msra.mxu0 0
    %242 = vmatprep.subr.bf16.mxu0 0
    %243 = vmatpush1.bf16.msra.mxu0 0
    %244 = vmatprep.subr.bf16.mxu0 0
    %245 = vmatpush1.bf16.msra.mxu0 %v135
    %246 = vmatprep.subr.bf16.mxu0 0
    %247 = vmatpush1.bf16.msra.mxu0 %v130
    %248 = vmatprep.subr.bf16.mxu0 0
    %249 = vmatpush2.bf16.msra.mxu0 0
    %250 = vmatprep.subr.bf16.mxu0 0
    %251 = vmatpush2.bf16.msra.mxu0 0
    %252 = vmatprep.subr.bf16.mxu0 0
    %253 = vmatpush2.bf16.msra.mxu0 0
    %254 = vmatprep.subr.bf16.mxu0 0
    %255 = vmatpush2.bf16.msra.mxu0 0
    %256 = vmatprep.subr.bf16.mxu0 0
    %257 = vmatpush2.bf16.msra.mxu0 0
    %258 = vmatprep.subr.bf16.mxu0 0
    %259 = vmatpush2.bf16.msra.mxu0 0
    %260 = vmatprep.subr.bf16.mxu0 0
    %261 = vmatpush2.bf16.msra.mxu0 0
    %262 = vmatprep.subr.bf16.mxu0 0
    %263 = vmatpush2.bf16.msra.mxu0 0
    %264 = vmatprep.mubr.bf16.mxu0 0
    %265 = vmatmul.mubr.bf16.gmra.mxu0 %v148
    %v266 = vpop.f32.mrf.mxu0
    %v267 = vadd.f32 %v88, %v266
    %v268 = vpop.f32.mrf.mxu0
    %v269 = vpop.f32.mrf.mxu0
    %v270 = vpop.f32.mrf.mxu0
    %271 = vdwg.mxu0
    %272 = vst [vmem:[#allocation8] sm:$0xff] %v185
    %273 = vst [vmem:[#allocation8 + $0x8] sm:$0xff] %v187
    %274 = vst [vmem:[#allocation8 + $0x10] sm:$0xff] %v226
    %275 = vst [vmem:[#allocation8 + $0x18] sm:$0xff] %v228
    %276 = vst [vmem:[#allocation8 + $0x20] sm:$0xff] %v267
    // Predicated region
    $region26: #{prediction_forward.1} parent=1 // pred_check
      _
    $region27: #{prediction_forward.1} parent=1 // pred_check_branch
      %278 = sbr.rel (0) target = $region29
    $region28: #{prediction_forward.1} parent=1 // pred_region
      %s280 = ssub.s32 640, 640
      %281 = vsyncadd [#allocation4], %s280
      %s283 = sshll.u32 [#allocation8], 4
      %s284 = int_to_ptr.vmem [resolvable:$true] %s283
      %286 = dma.vmem_to_hbm [thread:$0]  %s284, 640, %s3, [#allocation4]
    $region29: #{prediction_forward.1} parent=1 // pred_fallthru
      _
    // Predicated region
    $region30: #{prediction_forward.1} parent=1 // pred_check
      _
    $region31: #{prediction_forward.1} parent=1 // pred_check_branch
      %288 = sbr.rel (0) target = $region33
    $region32: #{prediction_forward.1} parent=1 // pred_region
      %289 = dma.done [#allocation4], 640
    $region33: #{prediction_forward.1} parent=1 // pred_fallthru
      _
    %290 = vsyncpa [#allocation3], 1
    %291 = vsyncpa [#allocation6], 1
    %292 = vsyncpa [#allocation4], 1

</llo_original>
